<compile_context>
chip_gen: v7x
topology: tpu7x:2x2x1
jax: 0.10.0
libtpu: 0.0.40
codegen_flags: <defaults>
</compile_context>

<pallas_src>
import jax
import jax.numpy as jnp
from jax.experimental import pallas as pl
from jax.experimental.pallas import tpu as pltpu


def _round_up(x, m):
    return (x + m - 1) // m * m


# ---------------------------------------------------------------------------
# Pallas kernel:  out = relu(x_cat @ W1 + b1) @ Wo + bo      (dropout = eval)
# ---------------------------------------------------------------------------
def parser_kernel(x_ref, w1_ref, b1_ref, wo_ref, bo_ref, out_ref):
    # Single fused input projection (bf16 operands, f32 accumulation).
    h = jnp.dot(x_ref[...], w1_ref[...], preferred_element_type=jnp.float32)
    # Bias + ReLU epilogue in f32 (safe on v5e which has no bf16 VALU).
    h = jnp.maximum(h + b1_ref[...], 0.0)
    # TODO(synk): dropout is identity (eval mode); training-mode stochastic
    # masking would use pltpu.prng_seed / pltpu.prng_random_bits here.
    out = jnp.dot(h.astype(wo_ref.dtype), wo_ref[...],
                  preferred_element_type=jnp.float32) + bo_ref[...]
    out_ref[...] = out.astype(out_ref.dtype)


# ---------------------------------------------------------------------------
# Wrapper: batch-tiled pallas_call with VMEM-resident weights
# ---------------------------------------------------------------------------
def parser_forward_pallas(x_cat, w1, b1, wo, bo, *, tile_b=None):
    """x_cat: [B, K_cat] bf16; w1: [K_cat, H] bf16; wo: [H, N_pad] bf16;
    b1: [1, H] f32; bo: [1, N_pad] f32.  Returns [B, N_pad] f32."""
    B, K = x_cat.shape
    H = w1.shape[1]
    Np = wo.shape[1]

    if tile_b is None:
        # Small batches: one tile (sublane-aligned).  Large batches: 256-row
        # tiles keep double-buffered bf16 activations well under VMEM even on
        # v7x (64 MiB physical / 32 MiB scoped), while weights stay resident.
        tile_b = _round_up(B, 8) if B <= 256 else 256
    B_pad = _round_up(B, tile_b)
    if B_pad != B:
        x_cat = jnp.pad(x_cat, ((0, B_pad - B), (0, 0)))

    out = pl.pallas_call(
        parser_kernel,
        out_shape=jax.ShapeDtypeStruct((B_pad, Np), jnp.float32),
        grid_spec=pltpu.PrefetchScalarGridSpec(
            num_scalar_prefetch=0,
            grid=(B_pad // tile_b,),
            in_specs=[
                pl.BlockSpec((tile_b, K), lambda i: (i, 0)),   # activations
                pl.BlockSpec((K, H),      lambda i: (0, 0)),   # W1 (resident)
                pl.BlockSpec((1, H),      lambda i: (0, 0)),   # b1
                pl.BlockSpec((H, Np),     lambda i: (0, 0)),   # Wo (resident)
                pl.BlockSpec((1, Np),     lambda i: (0, 0)),   # bo
            ],
            out_specs=pl.BlockSpec((tile_b, Np), lambda i: (i, 0)),
        ),
        compiler_params=pltpu.CompilerParams(
            dimension_semantics=("parallel",)),   # megacore-shardable on v7x
    )(x_cat, w1, b1, wo, bo)
    return out[:B]


# ---------------------------------------------------------------------------
# Parameter construction (mirrors ParserModel.__init__ shapes)
# ---------------------------------------------------------------------------
def xavier_uniform(key, shape):
    fan_in, fan_out = shape[0], shape[1]   # stored as [in, out]
    limit = jnp.sqrt(6.0 / (fan_in + fan_out))
    return jax.random.uniform(key, shape, jnp.float32, -limit, limit)


def make_params(key, *, vocab_w, vocab_t, vocab_l,
                embed_size, n_words, n_tags, n_labels,
                hidden_size, n_classes):
    ks = jax.random.split(key, 11)
    return {
        # embedding tables
        "emb_w": jax.random.normal(ks[0], (vocab_w, embed_size), jnp.float32) * 0.1,
        "emb_t": jax.random.normal(ks[1], (vocab_t, embed_size), jnp.float32) * 0.1,
        "emb_l": jax.random.normal(ks[2], (vocab_l, embed_size), jnp.float32) * 0.1,
        # input projections, stored as [in, out] (transposed vs nn.Linear.weight)
        "ww": xavier_uniform(ks[3], (n_words * embed_size, hidden_size)),
        "wt": xavier_uniform(ks[4], (n_tags * embed_size, hidden_size)),
        "wl": xavier_uniform(ks[5], (n_labels * embed_size, hidden_size)),
        "wo": xavier_uniform(ks[6], (hidden_size, n_classes)),
        # biases kept 2-D [1, out]
        "bw": jax.random.uniform(ks[7], (1, hidden_size), jnp.float32, -0.05, 0.05),
        "bt": jax.random.uniform(ks[8], (1, hidden_size), jnp.float32, -0.05, 0.05),
        "bl": jax.random.uniform(ks[9], (1, hidden_size), jnp.float32, -0.05, 0.05),
        "bo": jax.random.uniform(ks[10], (1, n_classes), jnp.float32, -0.05, 0.05),
    }


def fuse_params(params):
    """Host-side fusion: stack W1, pre-sum b1, pad output dim to 128 lanes,
    cast matmul operands to bf16 (biases stay f32)."""
    n_classes = params["wo"].shape[1]
    n_pad = _round_up(n_classes, 128)
    w1 = jnp.concatenate([params["ww"], params["wt"], params["wl"]], axis=0)
    b1 = params["bw"] + params["bt"] + params["bl"]
    wo = jnp.pad(params["wo"], ((0, 0), (0, n_pad - n_classes)))   # zero cols
    bo = jnp.pad(params["bo"], ((0, 0), (0, n_pad - n_classes)))
    return {
        "w1": w1.astype(jnp.bfloat16),
        "b1": b1.astype(jnp.float32),
        "wo": wo.astype(jnp.bfloat16),
        "bo": bo.astype(jnp.float32),
        "n_classes": n_classes,
    }


def parser_model_forward(params, fused, w_features, t_features, l_features):
    """Full forward: embedding gather (glue) + fused Pallas MLP."""
    B = w_features.shape[0]
    # TODO(synk): embedding gather could be fused into the kernel via
    # scalar-prefetched indices + DMA gather from pl.ANY-space tables to avoid
    # the HBM round-trip of the gathered activations at large batch.
    xw = jnp.take(params["emb_w"], w_features, axis=0).reshape(B, -1)
    xt = jnp.take(params["emb_t"], t_features, axis=0).reshape(B, -1)
    xl = jnp.take(params["emb_l"], l_features, axis=0).reshape(B, -1)
    x_cat = jnp.concatenate([xw, xt, xl], axis=1).astype(jnp.bfloat16)
    out_pad = parser_forward_pallas(x_cat, fused["w1"], fused["b1"],
                                    fused["wo"], fused["bo"])
    return out_pad[:, :fused["n_classes"]]


# ---------------------------------------------------------------------------
# Pure-JAX f32 reference for correctness check
# ---------------------------------------------------------------------------
def parser_model_reference(params, w_features, t_features, l_features):
    B = w_features.shape[0]
    xw = jnp.take(params["emb_w"], w_features, axis=0).reshape(B, -1)
    xt = jnp.take(params["emb_t"], t_features, axis=0).reshape(B, -1)
    xl = jnp.take(params["emb_l"], l_features, axis=0).reshape(B, -1)
    hidden = (xw @ params["ww"] + params["bw"]
              + xt @ params["wt"] + params["bt"]
              + xl @ params["wl"] + params["bl"])
    hidden = jnp.maximum(hidden, 0.0)          # ReLU; dropout = identity (eval)
    return hidden @ params["wo"] + params["bo"]


if __name__ == "__main__":
    # Small shapes consistent with the module's forward.
    B = 8
    embed_size = 32
    n_words, n_tags, n_labels = 18, 18, 12      # K_cat = 48*32 = 1536
    hidden_size = 128
    n_classes = 80
    vocab_w, vocab_t, vocab_l = 100, 20, 15

    key = jax.random.PRNGKey(0)
    pkey, kw, kt, kl = jax.random.split(key, 4)

    params = make_params(pkey,
                         vocab_w=vocab_w, vocab_t=vocab_t, vocab_l=vocab_l,
                         embed_size=embed_size, n_words=n_words,
                         n_tags=n_tags, n_labels=n_labels,
                         hidden_size=hidden_size, n_classes=n_classes)
    fused = fuse_params(params)

    w_features = jax.random.randint(kw, (B, n_words), 0, vocab_w, jnp.int32)
    t_features = jax.random.randint(kt, (B, n_tags), 0, vocab_t, jnp.int32)
    l_features = jax.random.randint(kl, (B, n_labels), 0, vocab_l, jnp.int32)

    out = parser_model_forward(params, fused, w_features, t_features, l_features)
    out = jax.block_until_ready(out)

    ref = parser_model_reference(params, w_features, t_features, l_features)
    assert out.shape == (B, n_classes), out.shape
    # bf16 operands with f32 accumulation -> loosened tolerance vs f32 ref.
    assert jnp.allclose(out, ref, atol=2e-2, rtol=2e-2), (
        "mismatch vs reference: max abs err = "
        f"{float(jnp.max(jnp.abs(out - ref)))}")

    print("KERNEL_OK")
</pallas_src>

<mosaic_0001>
module attributes {stable_mosaic.version = 11 : i64} {
  func.func @parser_kernel(%arg0: i32, %arg1: memref<8x1536xbf16, #tpu.memory_space<vmem>>, %arg2: memref<1536x128xbf16, #tpu.memory_space<vmem>>, %arg3: memref<1x128xf32, #tpu.memory_space<vmem>>, %arg4: memref<128x128xbf16, #tpu.memory_space<vmem>>, %arg5: memref<1x128xf32, #tpu.memory_space<vmem>>, %arg6: memref<8x128xf32, #tpu.memory_space<vmem>>) attributes {dimension_semantics = [#tpu.dimension_semantics<parallel>], iteration_bounds = array<i64: 1>, scalar_prefetch = 0 : i64, scratch_operands = 0 : i64, tpu.core_type = #tpu.core_type<tc>, window_params = [{transform_indices = @transform_0, window_bounds = array<i64: 8, 1536>}, {pipeline_mode = #tpu.pipeline_mode<synchronous>, transform_indices = @transform_1, window_bounds = array<i64: 1536, 128>}, {pipeline_mode = #tpu.pipeline_mode<synchronous>, transform_indices = @transform_2, window_bounds = array<i64: 1, 128>}, {pipeline_mode = #tpu.pipeline_mode<synchronous>, transform_indices = @transform_3, window_bounds = array<i64: 128, 128>}, {pipeline_mode = #tpu.pipeline_mode<synchronous>, transform_indices = @transform_4, window_bounds = array<i64: 1, 128>}, {transform_indices = @transform_5, window_bounds = array<i64: 8, 128>}]} {
    %c0 = arith.constant 0 : index
    %c0_0 = arith.constant 0 : index
    %0 = vector.load %arg1[%c0, %c0_0] : memref<8x1536xbf16, #tpu.memory_space<vmem>>, vector<8x1536xbf16>
    %c0_1 = arith.constant 0 : index
    %c0_2 = arith.constant 0 : index
    %1 = vector.load %arg2[%c0_1, %c0_2] : memref<1536x128xbf16, #tpu.memory_space<vmem>>, vector<1536x128xbf16>
    %cst = arith.constant dense<0.000000e+00> : vector<8x128xf32>
    %2 = tpu.matmul %0, %1, %cst {dimension_numbers = #tpu.dot_dimension_numbers<[1], [0], [0], [1], [0, 0, 1, 1], [], []>} : vector<8x1536xbf16>, vector<1536x128xbf16>, vector<8x128xf32> -> vector<8x128xf32>
    %c0_3 = arith.constant 0 : index
    %c0_4 = arith.constant 0 : index
    %3 = vector.load %arg3[%c0_3, %c0_4] : memref<1x128xf32, #tpu.memory_space<vmem>>, vector<1x128xf32>
    %4 = vector.broadcast %3 : vector<1x128xf32> to vector<8x128xf32>
    %5 = arith.addf %2, %4 : vector<8x128xf32>
    %cst_5 = arith.constant 0.000000e+00 : f32
    %6 = vector.broadcast %cst_5 : f32 to vector<8x128xf32>
    %7 = arith.maximumf %5, %6 : vector<8x128xf32>
    %8 = arith.truncf %7 : vector<8x128xf32> to vector<8x128xbf16>
    %c0_6 = arith.constant 0 : index
    %c0_7 = arith.constant 0 : index
    %9 = vector.load %arg4[%c0_6, %c0_7] : memref<128x128xbf16, #tpu.memory_space<vmem>>, vector<128x128xbf16>
    %cst_8 = arith.constant dense<0.000000e+00> : vector<8x128xf32>
    %10 = tpu.matmul %8, %9, %cst_8 {dimension_numbers = #tpu.dot_dimension_numbers<[1], [0], [0], [1], [0, 0, 1, 1], [], []>} : vector<8x128xbf16>, vector<128x128xbf16>, vector<8x128xf32> -> vector<8x128xf32>
    %c0_9 = arith.constant 0 : index
    %c0_10 = arith.constant 0 : index
    %11 = vector.load %arg5[%c0_9, %c0_10] : memref<1x128xf32, #tpu.memory_space<vmem>>, vector<1x128xf32>
    %12 = vector.broadcast %11 : vector<1x128xf32> to vector<8x128xf32>
    %13 = arith.addf %10, %12 : vector<8x128xf32>
    %c0_11 = arith.constant 0 : index
    %c0_12 = arith.constant 0 : index
    %14 = vector.load %arg6[%c0_11, %c0_12] : memref<8x128xf32, #tpu.memory_space<vmem>>, vector<8x128xf32>
    tpu.vector_store %arg6[%c0_11, %c0_12], %13 {strides = array<i32>} : memref<8x128xf32, #tpu.memory_space<vmem>>, vector<8x128xf32>,
    return
  }
  func.func @transform_0(%arg0: i32) -> (i32, i32) {
    %c0_i32 = arith.constant 0 : i32
    %c0_i32_0 = arith.constant 0 : i32
    return %arg0, %c0_i32 : i32, i32
  }
  func.func @transform_1(%arg0: i32) -> (i32, i32) {
    %c0_i32 = arith.constant 0 : i32
    %c0_i32_0 = arith.constant 0 : i32
    %c0_i32_1 = arith.constant 0 : i32
    return %c0_i32, %c0_i32_0 : i32, i32
  }
  func.func @transform_2(%arg0: i32) -> (i32, i32) {
    %c0_i32 = arith.constant 0 : i32
    %c0_i32_0 = arith.constant 0 : i32
    %c0_i32_1 = arith.constant 0 : i32
    return %c0_i32, %c0_i32_0 : i32, i32
  }
  func.func @transform_3(%arg0: i32) -> (i32, i32) {
    %c0_i32 = arith.constant 0 : i32
    %c0_i32_0 = arith.constant 0 : i32
    %c0_i32_1 = arith.constant 0 : i32
    return %c0_i32, %c0_i32_0 : i32, i32
  }
  func.func @transform_4(%arg0: i32) -> (i32, i32) {
    %c0_i32 = arith.constant 0 : i32
    %c0_i32_0 = arith.constant 0 : i32
    %c0_i32_1 = arith.constant 0 : i32
    return %c0_i32, %c0_i32_0 : i32, i32
  }
  func.func @transform_5(%arg0: i32) -> (i32, i32) {
    %c0_i32 = arith.constant 0 : i32
    %c0_i32_0 = arith.constant 0 : i32
    return %arg0, %c0_i32 : i32, i32
  }
}

</mosaic_0001>

<llo_original>
// kernel: tpu_custom_call.1
$region0: #{tpu_custom_call.1}
  #allocation0 [shape = 'u32[]', space=smem, size = 0x4, offset = 0x4, fixed_abs, tag = 'smem constant byte address 0x4 - core index']
  #allocation1 [shape = 'u32[144,128]{1,0:T(1,128)}', space=vmem, size = 0x12000, scoped, tag = 'internal scratch']
  %s0 = inlined_call_operand.hbm [shape: bf16[8,1536], index: 0, kind: input, shape index: {}]
  %s1 = inlined_call_operand.hbm [shape: bf16[1536,128], index: 1, kind: input, shape index: {}]
  %s2 = inlined_call_operand.vmem [shape: f32[1,128], index: 2, kind: input, shape index: {}]
  %s3 = inlined_call_operand.hbm [shape: bf16[128,128], index: 3, kind: input, shape index: {}]
  %s4 = inlined_call_operand.vmem [shape: f32[1,128], index: 4, kind: input, shape index: {}]
  %s5 = inlined_call_operand.hbm [shape: f32[8,128], index: 5, kind: output, shape index: {}]
  %s6 = sld [smem:[#allocation0]]
  $region42: #{tpu_custom_call.1} parent=0
    _
  %s8 = ssub.s32 1, %s6
  %s9 = scalar_select 0, %s8, %s6
  $region1: #{tpu_custom_call.1} parent=0
    #allocation2 [shape = 'u8[24576]{0}', space=vmem, size = 0x6000, scoped, tag = 'input window, operand 0, single buffered']
    #allocation3 [shape = 's32[1]{0}', space=sflag, size = 0x4, scoped, tag = 'scoped memory for tpu_custom_call.1']
    #allocation4 [shape = 's32[1]{0}', space=sflag, size = 0x4, scoped, tag = 'scoped memory for tpu_custom_call.1']
    #allocation5 [shape = 'u8[393216]{0}', space=vmem, size = 0x60000, scoped, tag = 'input window, operand 1, single buffered']
    #allocation6 [shape = 's32[1]{0}', space=sflag, size = 0x4, scoped, tag = 'scoped memory for tpu_custom_call.1']
    #allocation7 [shape = 'u8[32768]{0}', space=vmem, size = 0x8000, scoped, tag = 'input window, operand 3, single buffered']
    #allocation8 [shape = 'u8[4096]{0}', space=vmem, size = 0x1000, scoped, tag = 'output window, operand 0, single buffered']
    %10 = vsyncpa [#allocation3], 0
    %11 = vsyncpa [#allocation6], 0
    %12 = vsyncpa [#allocation4], 0
    // Predicated region
    $region2: #{tpu_custom_call.1} parent=1 // pred_check
      _
    $region3: #{tpu_custom_call.1} parent=1 // pred_check_branch
      %14 = sbr.rel (0) target = $region5
    $region4: #{tpu_custom_call.1} parent=1 // pred_region
      %s16 = ssub.s32 768, 768
      %17 = vsyncadd [#allocation3], %s16
      %s19 = sshll.u32 [#allocation2], 4
      %s20 = int_to_ptr.vmem [resolvable:$true] %s19
      %22 = dma.hbm_to_vmem [thread:$0]  %s0, 768, %s20, [#allocation3]
    $region5: #{tpu_custom_call.1} parent=1 // pred_fallthru
      _
    // Predicated region
    $region6: #{tpu_custom_call.1} parent=1 // pred_check
      _
    $region7: #{tpu_custom_call.1} parent=1 // pred_check_branch
      %24 = sbr.rel (0) target = $region9
    $region8: #{tpu_custom_call.1} parent=1 // pred_region
      %s26 = ssub.s32 12288, 12288
      %27 = vsyncadd [#allocation6], %s26
      %s28 = sshll.u32 [#allocation5], 4
      %s29 = int_to_ptr.vmem [resolvable:$true] %s28
      %34 = dma.hbm_to_vmem [thread:$0]  %s1, 12288, %s29, [#allocation6], 64, 64, 4
    $region9: #{tpu_custom_call.1} parent=1 // pred_fallthru
      _
    // Predicated region
    $region10: #{tpu_custom_call.1} parent=1 // pred_check
      _
    $region11: #{tpu_custom_call.1} parent=1 // pred_check_branch
      %36 = sbr.rel (0) target = $region13
    $region12: #{tpu_custom_call.1} parent=1 // pred_region
      _
    $region13: #{tpu_custom_call.1} parent=1 // pred_fallthru
      _
    // Predicated region
    $region14: #{tpu_custom_call.1} parent=1 // pred_check
      _
    $region15: #{tpu_custom_call.1} parent=1 // pred_check_branch
      %38 = sbr.rel (0) target = $region17
    $region16: #{tpu_custom_call.1} parent=1 // pred_region
      %s40 = ssub.s32 1024, 1024
      %41 = vsyncadd [#allocation6], %s40
      %s42 = sshll.u32 [#allocation7], 4
      %s43 = int_to_ptr.vmem [resolvable:$true] %s42
      %48 = dma.hbm_to_vmem [thread:$0]  %s3, 1024, %s43, [#allocation6], 64, 64, 4
    $region17: #{tpu_custom_call.1} parent=1 // pred_fallthru
      _
    // Predicated region
    $region18: #{tpu_custom_call.1} parent=1 // pred_check
      _
    $region19: #{tpu_custom_call.1} parent=1 // pred_check_branch
      %50 = sbr.rel (0) target = $region21
    $region20: #{tpu_custom_call.1} parent=1 // pred_region
      _
    $region21: #{tpu_custom_call.1} parent=1 // pred_fallthru
      _
    // Predicated region
    $region22: #{tpu_custom_call.1} parent=1 // pred_check
      _
    $region23: #{tpu_custom_call.1} parent=1 // pred_check_branch
      %52 = sbr.rel (0) target = $region25
    $region24: #{tpu_custom_call.1} parent=1 // pred_region
      %53 = dma.done [#allocation3], 768
    $region25: #{tpu_custom_call.1} parent=1 // pred_fallthru
      _
    // Predicated region
    $region26: #{tpu_custom_call.1} parent=1 // pred_check
      _
    $region27: #{tpu_custom_call.1} parent=1 // pred_check_branch
      %55 = sbr.rel (0) target = $region29
    $region28: #{tpu_custom_call.1} parent=1 // pred_region
      %56 = dma.done [#allocation6], 12288
    $region29: #{tpu_custom_call.1} parent=1 // pred_fallthru
      _
    // Predicated region
    $region30: #{tpu_custom_call.1} parent=1 // pred_check
      _
    $region31: #{tpu_custom_call.1} parent=1 // pred_check_branch
      %58 = sbr.rel (0) target = $region33
    $region32: #{tpu_custom_call.1} parent=1 // pred_region
      %59 = dma.done [#allocation6], 1024
    $region33: #{tpu_custom_call.1} parent=1 // pred_fallthru
      _
    %v61 = vld [vmem:[#allocation2] sm:$0xff]
    %v62 = vld [vmem:[#allocation2 + $0x8] sm:$0xff]
    %v63 = vld [vmem:[#allocation2 + $0x10] sm:$0xff]
    %v64 = vld [vmem:[#allocation2 + $0x18] sm:$0xff]
    %v65 = vld [vmem:[#allocation2 + $0x20] sm:$0xff]
    %v66 = vld [vmem:[#allocation2 + $0x28] sm:$0xff]
    %v67 = vld [vmem:[#allocation5] sm:$0xf]
    %v68 = vld [vmem:[#allocation5 + $0x4] sm:$0xf]
    %v69 = vld [vmem:[#allocation5 + $0x8] sm:$0xf]
    %v70 = vld [vmem:[#allocation5 + $0xc] sm:$0xf]
    %v71 = vld [vmem:[#allocation5 + $0x10] sm:$0xf]
    %v72 = vld [vmem:[#allocation5 + $0x14] sm:$0xf]
    %v73 = vld [vmem:[#allocation5 + $0x18] sm:$0xf]
    %v74 = vld [vmem:[#allocation5 + $0x1c] sm:$0xf]
    %v75 = vld [vmem:[#allocation5 + $0x20] sm:$0xf]
    %v76 = vld [vmem:[#allocation5 + $0x24] sm:$0xf]
    %v77 = vld [vmem:[#allocation5 + $0x28] sm:$0xf]
    %v78 = vld [vmem:[#allocation5 + $0x2c] sm:$0xf]
    %v79 = vld [vmem:[#allocation5 + $0x30] sm:$0xf]
    %v80 = vld [vmem:[#allocation5 + $0x34] sm:$0xf]
    %v81 = vld [vmem:[#allocation5 + $0x38] sm:$0xf]
    %v82 = vld [vmem:[#allocation5 + $0x3c] sm:$0xf]
    %v83 = vld [vmem:[#allocation5 + $0x40] sm:$0xf]
    %v84 = vld [vmem:[#allocation5 + $0x44] sm:$0xf]
    %v85 = vld [vmem:[#allocation5 + $0x48] sm:$0xf]
    %v86 = vld [vmem:[#allocation5 + $0x4c] sm:$0xf]
    %v87 = vld [vmem:[#allocation5 + $0x50] sm:$0xf]
    %v88 = vld [vmem:[#allocation5 + $0x54] sm:$0xf]
    %v89 = vld [vmem:[#allocation5 + $0x58] sm:$0xf]
    %v90 = vld [vmem:[#allocation5 + $0x5c] sm:$0xf]
    %v91 = vld [vmem:[#allocation5 + $0x60] sm:$0xf]
    %v92 = vld [vmem:[#allocation5 + $0x64] sm:$0xf]
    %v93 = vld [vmem:[#allocation5 + $0x68] sm:$0xf]
    %v94 = vld [vmem:[#allocation5 + $0x6c] sm:$0xf]
    %v95 = vld [vmem:[#allocation5 + $0x70] sm:$0xf]
    %v96 = vld [vmem:[#allocation5 + $0x74] sm:$0xf]
    %v97 = vld [vmem:[#allocation5 + $0x78] sm:$0xf]
    %v98 = vld [vmem:[#allocation5 + $0x7c] sm:$0xf]
    %v99 = vld [vmem:[#allocation5 + $0x80] sm:$0xf]
    %v100 = vld [vmem:[#allocation5 + $0x84] sm:$0xf]
    %v101 = vld [vmem:[#allocation5 + $0x88] sm:$0xf]
    %v102 = vld [vmem:[#allocation5 + $0x8c] sm:$0xf]
    %v103 = vld [vmem:[#allocation5 + $0x90] sm:$0xf]
    %v104 = vld [vmem:[#allocation5 + $0x94] sm:$0xf]
    %v105 = vld [vmem:[#allocation5 + $0x98] sm:$0xf]
    %v106 = vld [vmem:[#allocation5 + $0x9c] sm:$0xf]
    %v107 = vld [vmem:[#allocation5 + $0xa0] sm:$0xf]
    %v108 = vld [vmem:[#allocation5 + $0xa4] sm:$0xf]
    %v109 = vld [vmem:[#allocation5 + $0xa8] sm:$0xf]
    %v110 = vld [vmem:[#allocation5 + $0xac] sm:$0xf]
    %v111 = vld [vmem:[#allocation5 + $0xb0] sm:$0xf]
    %v112 = vld [vmem:[#allocation5 + $0xb4] sm:$0xf]
    %v113 = vld [vmem:[#allocation5 + $0xb8] sm:$0xf]
    %v114 = vld [vmem:[#allocation5 + $0xbc] sm:$0xf]
    %v115 = vld [vmem:[#allocation5 + $0xc0] sm:$0xf]
    %v116 = vld [vmem:[#allocation5 + $0xc4] sm:$0xf]
    %v117 = vld [vmem:[#allocation5 + $0xc8] sm:$0xf]
    %v118 = vld [vmem:[#allocation5 + $0xcc] sm:$0xf]
    %v119 = vld [vmem:[#allocation5 + $0xd0] sm:$0xf]
    %v120 = vld [vmem:[#allocation5 + $0xd4] sm:$0xf]
    %v121 = vld [vmem:[#allocation5 + $0xd8] sm:$0xf]
    %v122 = vld [vmem:[#allocation5 + $0xdc] sm:$0xf]
    %v123 = vld [vmem:[#allocation5 + $0xe0] sm:$0xf]
    %v124 = vld [vmem:[#allocation5 + $0xe4] sm:$0xf]
    %v125 = vld [vmem:[#allocation5 + $0xe8] sm:$0xf]
    %v126 = vld [vmem:[#allocation5 + $0xec] sm:$0xf]
    %v127 = vld [vmem:[#allocation5 + $0xf0] sm:$0xf]
    %v128 = vld [vmem:[#allocation5 + $0xf4] sm:$0xf]
    %v129 = vld [vmem:[#allocation5 + $0xf8] sm:$0xf]
    %v130 = vld [vmem:[#allocation5 + $0xfc] sm:$0xf]
    %v131 = vld [vmem:[#allocation5 + $0x100] sm:$0xf]
    %v132 = vld [vmem:[#allocation5 + $0x104] sm:$0xf]
    %v133 = vld [vmem:[#allocation5 + $0x108] sm:$0xf]
    %v134 = vld [vmem:[#allocation5 + $0x10c] sm:$0xf]
    %v135 = vld [vmem:[#allocation5 + $0x110] sm:$0xf]
    %v136 = vld [vmem:[#allocation5 + $0x114] sm:$0xf]
    %v137 = vld [vmem:[#allocation5 + $0x118] sm:$0xf]
    %v138 = vld [vmem:[#allocation5 + $0x11c] sm:$0xf]
    %v139 = vld [vmem:[#allocation5 + $0x120] sm:$0xf]
    %v140 = vld [vmem:[#allocation5 + $0x124] sm:$0xf]
    %v141 = vld [vmem:[#allocation5 + $0x128] sm:$0xf]
    %v142 = vld [vmem:[#allocation5 + $0x12c] sm:$0xf]
    %v143 = vld [vmem:[#allocation5 + $0x130] sm:$0xf]
    %v144 = vld [vmem:[#allocation5 + $0x134] sm:$0xf]
    %v145 = vld [vmem:[#allocation5 + $0x138] sm:$0xf]
    %v146 = vld [vmem:[#allocation5 + $0x13c] sm:$0xf]
    %v147 = vld [vmem:[#allocation5 + $0x140] sm:$0xf]
    %v148 = vld [vmem:[#allocation5 + $0x144] sm:$0xf]
    %v149 = vld [vmem:[#allocation5 + $0x148] sm:$0xf]
    %v150 = vld [vmem:[#allocation5 + $0x14c] sm:$0xf]
    %v151 = vld [vmem:[#allocation5 + $0x150] sm:$0xf]
    %v152 = vld [vmem:[#allocation5 + $0x154] sm:$0xf]
    %v153 = vld [vmem:[#allocation5 + $0x158] sm:$0xf]
    %v154 = vld [vmem:[#allocation5 + $0x15c] sm:$0xf]
    %v155 = vld [vmem:[#allocation5 + $0x160] sm:$0xf]
    %v156 = vld [vmem:[#allocation5 + $0x164] sm:$0xf]
    %v157 = vld [vmem:[#allocation5 + $0x168] sm:$0xf]
    %v158 = vld [vmem:[#allocation5 + $0x16c] sm:$0xf]
    %v159 = vld [vmem:[#allocation5 + $0x170] sm:$0xf]
    %v160 = vld [vmem:[#allocation5 + $0x174] sm:$0xf]
    %v161 = vld [vmem:[#allocation5 + $0x178] sm:$0xf]
    %v162 = vld [vmem:[#allocation5 + $0x17c] sm:$0xf]
    %v163 = vld [vmem:[#allocation5 + $0x180] sm:$0xf]
    %v164 = vld [vmem:[#allocation5 + $0x184] sm:$0xf]
    %v165 = vld [vmem:[#allocation5 + $0x188] sm:$0xf]
    %v166 = vld [vmem:[#allocation5 + $0x18c] sm:$0xf]
    %v167 = vld [vmem:[#allocation5 + $0x190] sm:$0xf]
    %v168 = vld [vmem:[#allocation5 + $0x194] sm:$0xf]
    %v169 = vld [vmem:[#allocation5 + $0x198] sm:$0xf]
    %v170 = vld [vmem:[#allocation5 + $0x19c] sm:$0xf]
    %v171 = vld [vmem:[#allocation5 + $0x1a0] sm:$0xf]
    %v172 = vld [vmem:[#allocation5 + $0x1a4] sm:$0xf]
    %v173 = vld [vmem:[#allocation5 + $0x1a8] sm:$0xf]
    %v174 = vld [vmem:[#allocation5 + $0x1ac] sm:$0xf]
    %v175 = vld [vmem:[#allocation5 + $0x1b0] sm:$0xf]
    %v176 = vld [vmem:[#allocation5 + $0x1b4] sm:$0xf]
    %v177 = vld [vmem:[#allocation5 + $0x1b8] sm:$0xf]
    %v178 = vld [vmem:[#allocation5 + $0x1bc] sm:$0xf]
    %v179 = vld [vmem:[#allocation5 + $0x1c0] sm:$0xf]
    %v180 = vld [vmem:[#allocation5 + $0x1c4] sm:$0xf]
    %v181 = vld [vmem:[#allocation5 + $0x1c8] sm:$0xf]
    %v182 = vld [vmem:[#allocation5 + $0x1cc] sm:$0xf]
    %v183 = vld [vmem:[#allocation5 + $0x1d0] sm:$0xf]
    %v184 = vld [vmem:[#allocation5 + $0x1d4] sm:$0xf]
    %v185 = vld [vmem:[#allocation5 + $0x1d8] sm:$0xf]
    %v186 = vld [vmem:[#allocation5 + $0x1dc] sm:$0xf]
    %v187 = vld [vmem:[#allocation5 + $0x1e0] sm:$0xf]
    %v188 = vld [vmem:[#allocation5 + $0x1e4] sm:$0xf]
    %v189 = vld [vmem:[#allocation5 + $0x1e8] sm:$0xf]
    %v190 = vld [vmem:[#allocation5 + $0x1ec] sm:$0xf]
    %v191 = vld [vmem:[#allocation5 + $0x1f0] sm:$0xf]
    %v192 = vld [vmem:[#allocation5 + $0x1f4] sm:$0xf]
    %v193 = vld [vmem:[#allocation5 + $0x1f8] sm:$0xf]
    %v194 = vld [vmem:[#allocation5 + $0x1fc] sm:$0xf]
    %v195 = vld [vmem:[#allocation5 + $0x200] sm:$0xf]
    %v196 = vld [vmem:[#allocation5 + $0x204] sm:$0xf]
    %v197 = vld [vmem:[#allocation5 + $0x208] sm:$0xf]
    %v198 = vld [vmem:[#allocation5 + $0x20c] sm:$0xf]
    %v199 = vld [vmem:[#allocation5 + $0x210] sm:$0xf]
    %v200 = vld [vmem:[#allocation5 + $0x214] sm:$0xf]
    %v201 = vld [vmem:[#allocation5 + $0x218] sm:$0xf]
    %v202 = vld [vmem:[#allocation5 + $0x21c] sm:$0xf]
    %v203 = vld [vmem:[#allocation5 + $0x220] sm:$0xf]
    %v204 = vld [vmem:[#allocation5 + $0x224] sm:$0xf]
    %v205 = vld [vmem:[#allocation5 + $0x228] sm:$0xf]
    %v206 = vld [vmem:[#allocation5 + $0x22c] sm:$0xf]
    %v207 = vld [vmem:[#allocation5 + $0x230] sm:$0xf]
    %v208 = vld [vmem:[#allocation5 + $0x234] sm:$0xf]
    %v209 = vld [vmem:[#allocation5 + $0x238] sm:$0xf]
    %v210 = vld [vmem:[#allocation5 + $0x23c] sm:$0xf]
    %v211 = vld [vmem:[#allocation5 + $0x240] sm:$0xf]
    %v212 = vld [vmem:[#allocation5 + $0x244] sm:$0xf]
    %v213 = vld [vmem:[#allocation5 + $0x248] sm:$0xf]
    %v214 = vld [vmem:[#allocation5 + $0x24c] sm:$0xf]
    %v215 = vld [vmem:[#allocation5 + $0x250] sm:$0xf]
    %v216 = vld [vmem:[#allocation5 + $0x254] sm:$0xf]
    %v217 = vld [vmem:[#allocation5 + $0x258] sm:$0xf]
    %v218 = vld [vmem:[#allocation5 + $0x25c] sm:$0xf]
    %v219 = vld [vmem:[#allocation5 + $0x260] sm:$0xf]
    %v220 = vld [vmem:[#allocation5 + $0x264] sm:$0xf]
    %v221 = vld [vmem:[#allocation5 + $0x268] sm:$0xf]
    %v222 = vld [vmem:[#allocation5 + $0x26c] sm:$0xf]
    %v223 = vld [vmem:[#allocation5 + $0x270] sm:$0xf]
    %v224 = vld [vmem:[#allocation5 + $0x274] sm:$0xf]
    %v225 = vld [vmem:[#allocation5 + $0x278] sm:$0xf]
    %v226 = vld [vmem:[#allocation5 + $0x27c] sm:$0xf]
    %v227 = vld [vmem:[#allocation5 + $0x280] sm:$0xf]
    %v228 = vld [vmem:[#allocation5 + $0x284] sm:$0xf]
    %v229 = vld [vmem:[#allocation5 + $0x288] sm:$0xf]
    %v230 = vld [vmem:[#allocation5 + $0x28c] sm:$0xf]
    %v231 = vld [vmem:[#allocation5 + $0x290] sm:$0xf]
    %v232 = vld [vmem:[#allocation5 + $0x294] sm:$0xf]
    %v233 = vld [vmem:[#allocation5 + $0x298] sm:$0xf]
    %v234 = vld [vmem:[#allocation5 + $0x29c] sm:$0xf]
    %v235 = vld [vmem:[#allocation5 + $0x2a0] sm:$0xf]
    %v236 = vld [vmem:[#allocation5 + $0x2a4] sm:$0xf]
    %v237 = vld [vmem:[#allocation5 + $0x2a8] sm:$0xf]
    %v238 = vld [vmem:[#allocation5 + $0x2ac] sm:$0xf]
    %v239 = vld [vmem:[#allocation5 + $0x2b0] sm:$0xf]
    %v240 = vld [vmem:[#allocation5 + $0x2b4] sm:$0xf]
    %v241 = vld [vmem:[#allocation5 + $0x2b8] sm:$0xf]
    %v242 = vld [vmem:[#allocation5 + $0x2bc] sm:$0xf]
    %v243 = vld [vmem:[#allocation5 + $0x2c0] sm:$0xf]
    %v244 = vld [vmem:[#allocation5 + $0x2c4] sm:$0xf]
    %v245 = vld [vmem:[#allocation5 + $0x2c8] sm:$0xf]
    %v246 = vld [vmem:[#allocation5 + $0x2cc] sm:$0xf]
    %v247 = vld [vmem:[#allocation5 + $0x2d0] sm:$0xf]
    %v248 = vld [vmem:[#allocation5 + $0x2d4] sm:$0xf]
    %v249 = vld [vmem:[#allocation5 + $0x2d8] sm:$0xf]
    %v250 = vld [vmem:[#allocation5 + $0x2dc] sm:$0xf]
    %v251 = vld [vmem:[#allocation5 + $0x2e0] sm:$0xf]
    %v252 = vld [vmem:[#allocation5 + $0x2e4] sm:$0xf]
    %v253 = vld [vmem:[#allocation5 + $0x2e8] sm:$0xf]
    %v254 = vld [vmem:[#allocation5 + $0x2ec] sm:$0xf]
    %v255 = vld [vmem:[#allocation5 + $0x2f0] sm:$0xf]
    %v256 = vld [vmem:[#allocation5 + $0x2f4] sm:$0xf]
    %v257 = vld [vmem:[#allocation5 + $0x2f8] sm:$0xf]
    %v258 = vld [vmem:[#allocation5 + $0x2fc] sm:$0xf]
    %v259 = vld [vmem:[%s2] sm:$0x1]
    %v261 = vlaneseq
    %v262 = vshrl.u32 %v261, 7
    %v263 = vsub.s32 0, %v262
    %v264 = vrot.slane %v259, %v263
    %v272 = vunpack.c.l.b16 %v61
    %v273 = vunpack.c.h.b16 %v61
    %v274 = vunpack.c.l.b16 %v62
    %v275 = vunpack.c.h.b16 %v62
    %v276 = vunpack.c.l.b16 %v63
    %v277 = vunpack.c.h.b16 %v63
    %v278 = vunpack.c.l.b16 %v64
    %v279 = vunpack.c.h.b16 %v64
    %v280 = vunpack.c.l.b16 %v65
    %v281 = vunpack.c.h.b16 %v65
    %v282 = vunpack.c.l.b16 %v66
    %v283 = vunpack.c.h.b16 %v66
    %v284 = vpack.c.b16 %v272, %v272
    %v285 = vpack.c.b16 %v273, %v273
    %v286 = vpack.c.b16 %v274, %v274
    %v287 = vpack.c.b16 %v275, %v275
    %v288 = vpack.c.b16 %v276, %v276
    %v289 = vpack.c.b16 %v277, %v277
    %v290 = vpack.c.b16 %v278, %v278
    %v291 = vpack.c.b16 %v279, %v279
    %v292 = vpack.c.b16 %v280, %v280
    %v293 = vpack.c.b16 %v281, %v281
    %v294 = vpack.c.b16 %v282, %v282
    %v295 = vpack.c.b16 %v283, %v283
    %v500 = vunpack.c.l.b16 %v67
    %v501 = vunpack.c.l.b16 %v68
    %v502 = vunpack.c.l.b16 %v69
    %v503 = vunpack.c.l.b16 %v70
    %v504 = vunpack.c.l.b16 %v71
    %v505 = vunpack.c.l.b16 %v72
    %v506 = vunpack.c.l.b16 %v73
    %v507 = vunpack.c.l.b16 %v74
    %v508 = vunpack.c.l.b16 %v75
    %v509 = vunpack.c.l.b16 %v76
    %v510 = vunpack.c.l.b16 %v77
    %v511 = vunpack.c.l.b16 %v78
    %v512 = vunpack.c.l.b16 %v79
    %v513 = vunpack.c.l.b16 %v80
    %v514 = vunpack.c.l.b16 %v81
    %v515 = vunpack.c.l.b16 %v82
    %v516 = vunpack.c.l.b16 %v83
    %v517 = vunpack.c.l.b16 %v84
    %v518 = vunpack.c.l.b16 %v85
    %v519 = vunpack.c.l.b16 %v86
    %v520 = vunpack.c.l.b16 %v87
    %v521 = vunpack.c.l.b16 %v88
    %v522 = vunpack.c.l.b16 %v89
    %v523 = vunpack.c.l.b16 %v90
    %v524 = vunpack.c.l.b16 %v91
    %v525 = vunpack.c.l.b16 %v92
    %v526 = vunpack.c.l.b16 %v93
    %v527 = vunpack.c.l.b16 %v94
    %v528 = vunpack.c.l.b16 %v95
    %v529 = vunpack.c.l.b16 %v96
    %v530 = vunpack.c.l.b16 %v97
    %v531 = vunpack.c.l.b16 %v98
    %v532 = vunpack.c.l.b16 %v99
    %v533 = vunpack.c.l.b16 %v100
    %v534 = vunpack.c.l.b16 %v101
    %v535 = vunpack.c.l.b16 %v102
    %v536 = vunpack.c.l.b16 %v103
    %v537 = vunpack.c.l.b16 %v104
    %v538 = vunpack.c.l.b16 %v105
    %v539 = vunpack.c.l.b16 %v106
    %v540 = vunpack.c.l.b16 %v107
    %v541 = vunpack.c.l.b16 %v108
    %v542 = vunpack.c.l.b16 %v109
    %v543 = vunpack.c.l.b16 %v110
    %v544 = vunpack.c.l.b16 %v111
    %v545 = vunpack.c.l.b16 %v112
    %v546 = vunpack.c.l.b16 %v113
    %v547 = vunpack.c.l.b16 %v114
    %v548 = vunpack.c.l.b16 %v115
    %v549 = vunpack.c.l.b16 %v116
    %v550 = vunpack.c.l.b16 %v117
    %v551 = vunpack.c.l.b16 %v118
    %v552 = vunpack.c.l.b16 %v119
    %v553 = vunpack.c.l.b16 %v120
    %v554 = vunpack.c.l.b16 %v121
    %v555 = vunpack.c.l.b16 %v122
    %v556 = vunpack.c.l.b16 %v123
    %v557 = vunpack.c.l.b16 %v124
    %v558 = vunpack.c.l.b16 %v125
    %v559 = vunpack.c.l.b16 %v126
    %v560 = vunpack.c.l.b16 %v127
    %v561 = vunpack.c.l.b16 %v128
    %v562 = vunpack.c.l.b16 %v129
    %v563 = vunpack.c.l.b16 %v130
    %v564 = vunpack.c.l.b16 %v131
    %v565 = vunpack.c.l.b16 %v132
    %v566 = vunpack.c.l.b16 %v133
    %v567 = vunpack.c.l.b16 %v134
    %v568 = vunpack.c.l.b16 %v135
    %v569 = vunpack.c.l.b16 %v136
    %v570 = vunpack.c.l.b16 %v137
    %v571 = vunpack.c.l.b16 %v138
    %v572 = vunpack.c.l.b16 %v139
    %v573 = vunpack.c.l.b16 %v140
    %v574 = vunpack.c.l.b16 %v141
    %v575 = vunpack.c.l.b16 %v142
    %v576 = vunpack.c.l.b16 %v143
    %v577 = vunpack.c.l.b16 %v144
    %v578 = vunpack.c.l.b16 %v145
    %v579 = vunpack.c.l.b16 %v146
    %v580 = vunpack.c.l.b16 %v147
    %v581 = vunpack.c.l.b16 %v148
    %v582 = vunpack.c.l.b16 %v149
    %v583 = vunpack.c.l.b16 %v150
    %v584 = vunpack.c.l.b16 %v151
    %v585 = vunpack.c.l.b16 %v152
    %v586 = vunpack.c.l.b16 %v153
    %v587 = vunpack.c.l.b16 %v154
    %v588 = vunpack.c.l.b16 %v155
    %v589 = vunpack.c.l.b16 %v156
    %v590 = vunpack.c.l.b16 %v157
    %v591 = vunpack.c.l.b16 %v158
    %v592 = vunpack.c.l.b16 %v159
    %v593 = vunpack.c.l.b16 %v160
    %v594 = vunpack.c.l.b16 %v161
    %v595 = vunpack.c.l.b16 %v162
    %v596 = vunpack.c.l.b16 %v163
    %v597 = vunpack.c.l.b16 %v164
    %v598 = vunpack.c.l.b16 %v165
    %v599 = vunpack.c.l.b16 %v166
    %v600 = vunpack.c.l.b16 %v167
    %v601 = vunpack.c.l.b16 %v168
    %v602 = vunpack.c.l.b16 %v169
    %v603 = vunpack.c.l.b16 %v170
    %v604 = vunpack.c.l.b16 %v171
    %v605 = vunpack.c.l.b16 %v172
    %v606 = vunpack.c.l.b16 %v173
    %v607 = vunpack.c.l.b16 %v174
    %v608 = vunpack.c.l.b16 %v175
    %v609 = vunpack.c.l.b16 %v176
    %v610 = vunpack.c.l.b16 %v177
    %v611 = vunpack.c.l.b16 %v178
    %v612 = vunpack.c.l.b16 %v179
    %v613 = vunpack.c.l.b16 %v180
    %v614 = vunpack.c.l.b16 %v181
    %v615 = vunpack.c.l.b16 %v182
    %v616 = vunpack.c.l.b16 %v183
    %v617 = vunpack.c.l.b16 %v184
    %v618 = vunpack.c.l.b16 %v185
    %v619 = vunpack.c.l.b16 %v186
    %v620 = vunpack.c.l.b16 %v187
    %v621 = vunpack.c.l.b16 %v188
    %v622 = vunpack.c.l.b16 %v189
    %v623 = vunpack.c.l.b16 %v190
    %v624 = vunpack.c.l.b16 %v191
    %v625 = vunpack.c.l.b16 %v192
    %v626 = vunpack.c.l.b16 %v193
    %v627 = vunpack.c.l.b16 %v194
    %v628 = vunpack.c.l.b16 %v195
    %v629 = vunpack.c.l.b16 %v196
    %v630 = vunpack.c.l.b16 %v197
    %v631 = vunpack.c.l.b16 %v198
    %v632 = vunpack.c.l.b16 %v199
    %v633 = vunpack.c.l.b16 %v200
    %v634 = vunpack.c.l.b16 %v201
    %v635 = vunpack.c.l.b16 %v202
    %v636 = vunpack.c.l.b16 %v203
    %v637 = vunpack.c.l.b16 %v204
    %v638 = vunpack.c.l.b16 %v205
    %v639 = vunpack.c.l.b16 %v206
    %v640 = vunpack.c.l.b16 %v207
    %v641 = vunpack.c.l.b16 %v208
    %v642 = vunpack.c.l.b16 %v209
    %v643 = vunpack.c.l.b16 %v210
    %v644 = vunpack.c.l.b16 %v211
    %v645 = vunpack.c.l.b16 %v212
    %v646 = vunpack.c.l.b16 %v213
    %v647 = vunpack.c.l.b16 %v214
    %v648 = vunpack.c.l.b16 %v215
    %v649 = vunpack.c.l.b16 %v216
    %v650 = vunpack.c.l.b16 %v217
    %v651 = vunpack.c.l.b16 %v218
    %v652 = vunpack.c.l.b16 %v219
    %v653 = vunpack.c.l.b16 %v220
    %v654 = vunpack.c.l.b16 %v221
    %v655 = vunpack.c.l.b16 %v222
    %v656 = vunpack.c.l.b16 %v223
    %v657 = vunpack.c.l.b16 %v224
    %v658 = vunpack.c.l.b16 %v225
    %v659 = vunpack.c.l.b16 %v226
    %v660 = vunpack.c.l.b16 %v227
    %v661 = vunpack.c.l.b16 %v228
    %v662 = vunpack.c.l.b16 %v229
    %v663 = vunpack.c.l.b16 %v230
    %v664 = vunpack.c.l.b16 %v231
    %v665 = vunpack.c.l.b16 %v232
    %v666 = vunpack.c.l.b16 %v233
    %v667 = vunpack.c.l.b16 %v234
    %v668 = vunpack.c.l.b16 %v235
    %v669 = vunpack.c.l.b16 %v236
    %v670 = vunpack.c.l.b16 %v237
    %v671 = vunpack.c.l.b16 %v238
    %v672 = vunpack.c.l.b16 %v239
    %v673 = vunpack.c.l.b16 %v240
    %v674 = vunpack.c.l.b16 %v241
    %v675 = vunpack.c.l.b16 %v242
    %v676 = vunpack.c.l.b16 %v243
    %v677 = vunpack.c.l.b16 %v244
    %v678 = vunpack.c.l.b16 %v245
    %v679 = vunpack.c.l.b16 %v246
    %v680 = vunpack.c.l.b16 %v247
    %v681 = vunpack.c.l.b16 %v248
    %v682 = vunpack.c.l.b16 %v249
    %v683 = vunpack.c.l.b16 %v250
    %v684 = vunpack.c.l.b16 %v251
    %v685 = vunpack.c.l.b16 %v252
    %v686 = vunpack.c.l.b16 %v253
    %v687 = vunpack.c.l.b16 %v254
    %v688 = vunpack.c.l.b16 %v255
    %v689 = vunpack.c.l.b16 %v256
    %v690 = vunpack.c.l.b16 %v257
    %v691 = vunpack.c.l.b16 %v258
    %v692 = vpack.c.b16 %v501, %v500
    %v693 = vpack.c.b16 %v503, %v502
    %v694 = vpack.c.b16 %v505, %v504
    %v695 = vpack.c.b16 %v507, %v506
    %v696 = vpack.c.b16 %v509, %v508
    %v697 = vpack.c.b16 %v511, %v510
    %v698 = vpack.c.b16 %v513, %v512
    %v699 = vpack.c.b16 %v515, %v514
    %v700 = vpack.c.b16 %v517, %v516
    %v701 = vpack.c.b16 %v519, %v518
    %v702 = vpack.c.b16 %v521, %v520
    %v703 = vpack.c.b16 %v523, %v522
    %v704 = vpack.c.b16 %v525, %v524
    %v705 = vpack.c.b16 %v527, %v526
    %v706 = vpack.c.b16 %v529, %v528
    %v707 = vpack.c.b16 %v531, %v530
    %v708 = vpack.c.b16 %v533, %v532
    %v709 = vpack.c.b16 %v535, %v534
    %v710 = vpack.c.b16 %v537, %v536
    %v711 = vpack.c.b16 %v539, %v538
    %v712 = vpack.c.b16 %v541, %v540
    %v713 = vpack.c.b16 %v543, %v542
    %v714 = vpack.c.b16 %v545, %v544
    %v715 = vpack.c.b16 %v547, %v546
    %v716 = vpack.c.b16 %v549, %v548
    %v717 = vpack.c.b16 %v551, %v550
    %v718 = vpack.c.b16 %v553, %v552
    %v719 = vpack.c.b16 %v555, %v554
    %v720 = vpack.c.b16 %v557, %v556
    %v721 = vpack.c.b16 %v559, %v558
    %v722 = vpack.c.b16 %v561, %v560
    %v723 = vpack.c.b16 %v563, %v562
    %v724 = vpack.c.b16 %v565, %v564
    %v725 = vpack.c.b16 %v567, %v566
    %v726 = vpack.c.b16 %v569, %v568
    %v727 = vpack.c.b16 %v571, %v570
    %v728 = vpack.c.b16 %v573, %v572
    %v729 = vpack.c.b16 %v575, %v574
    %v730 = vpack.c.b16 %v577, %v576
    %v731 = vpack.c.b16 %v579, %v578
    %v732 = vpack.c.b16 %v581, %v580
    %v733 = vpack.c.b16 %v583, %v582
    %v734 = vpack.c.b16 %v585, %v584
    %v735 = vpack.c.b16 %v587, %v586
    %v736 = vpack.c.b16 %v589, %v588
    %v737 = vpack.c.b16 %v591, %v590
    %v738 = vpack.c.b16 %v593, %v592
    %v739 = vpack.c.b16 %v595, %v594
    %v740 = vpack.c.b16 %v597, %v596
    %v741 = vpack.c.b16 %v599, %v598
    %v742 = vpack.c.b16 %v601, %v600
    %v743 = vpack.c.b16 %v603, %v602
    %v744 = vpack.c.b16 %v605, %v604
    %v745 = vpack.c.b16 %v607, %v606
    %v746 = vpack.c.b16 %v609, %v608
    %v747 = vpack.c.b16 %v611, %v610
    %v748 = vpack.c.b16 %v613, %v612
    %v749 = vpack.c.b16 %v615, %v614
    %v750 = vpack.c.b16 %v617, %v616
    %v751 = vpack.c.b16 %v619, %v618
    %v752 = vpack.c.b16 %v621, %v620
    %v753 = vpack.c.b16 %v623, %v622
    %v754 = vpack.c.b16 %v625, %v624
    %v755 = vpack.c.b16 %v627, %v626
    %v756 = vpack.c.b16 %v629, %v628
    %v757 = vpack.c.b16 %v631, %v630
    %v758 = vpack.c.b16 %v633, %v632
    %v759 = vpack.c.b16 %v635, %v634
    %v760 = vpack.c.b16 %v637, %v636
    %v761 = vpack.c.b16 %v639, %v638
    %v762 = vpack.c.b16 %v641, %v640
    %v763 = vpack.c.b16 %v643, %v642
    %v764 = vpack.c.b16 %v645, %v644
    %v765 = vpack.c.b16 %v647, %v646
    %v766 = vpack.c.b16 %v649, %v648
    %v767 = vpack.c.b16 %v651, %v650
    %v768 = vpack.c.b16 %v653, %v652
    %v769 = vpack.c.b16 %v655, %v654
    %v770 = vpack.c.b16 %v657, %v656
    %v771 = vpack.c.b16 %v659, %v658
    %v772 = vpack.c.b16 %v661, %v660
    %v773 = vpack.c.b16 %v663, %v662
    %v774 = vpack.c.b16 %v665, %v664
    %v775 = vpack.c.b16 %v667, %v666
    %v776 = vpack.c.b16 %v669, %v668
    %v777 = vpack.c.b16 %v671, %v670
    %v778 = vpack.c.b16 %v673, %v672
    %v779 = vpack.c.b16 %v675, %v674
    %v780 = vpack.c.b16 %v677, %v676
    %v781 = vpack.c.b16 %v679, %v678
    %v782 = vpack.c.b16 %v681, %v680
    %v783 = vpack.c.b16 %v683, %v682
    %v784 = vpack.c.b16 %v685, %v684
    %v785 = vpack.c.b16 %v687, %v686
    %v786 = vpack.c.b16 %v689, %v688
    %v787 = vpack.c.b16 %v691, %v690
    %884 = vmatprep.subr.bf16.mxu0 0
    %885 = vmatpush1.bf16.msra.mxu0 %v692
    %886 = vmatprep.subr.bf16.mxu0 0
    %887 = vmatpush1.bf16.msra.mxu0 %v693
    %888 = vmatprep.subr.bf16.mxu0 0
    %889 = vmatpush1.bf16.msra.mxu0 %v694
    %890 = vmatprep.subr.bf16.mxu0 0
    %891 = vmatpush1.bf16.msra.mxu0 %v695
    %892 = vmatprep.subr.bf16.mxu0 0
    %893 = vmatpush1.bf16.msra.mxu0 %v696
    %894 = vmatprep.subr.bf16.mxu0 0
    %895 = vmatpush1.bf16.msra.mxu0 %v697
    %896 = vmatprep.subr.bf16.mxu0 0
    %897 = vmatpush1.bf16.msra.mxu0 %v698
    %898 = vmatprep.subr.bf16.mxu0 0
    %899 = vmatpush1.bf16.msra.mxu0 %v699
    %900 = vmatprep.subr.bf16.mxu0 0
    %901 = vmatpush1.bf16.msra.mxu0 %v700
    %902 = vmatprep.subr.bf16.mxu0 0
    %903 = vmatpush1.bf16.msra.mxu0 %v701
    %904 = vmatprep.subr.bf16.mxu0 0
    %905 = vmatpush1.bf16.msra.mxu0 %v702
    %906 = vmatprep.subr.bf16.mxu0 0
    %907 = vmatpush1.bf16.msra.mxu0 %v703
    %908 = vmatprep.subr.bf16.mxu0 0
    %909 = vmatpush1.bf16.msra.mxu0 %v704
    %910 = vmatprep.subr.bf16.mxu0 0
    %911 = vmatpush1.bf16.msra.mxu0 %v705
    %912 = vmatprep.subr.bf16.mxu0 0
    %913 = vmatpush1.bf16.msra.mxu0 %v706
    %914 = vmatprep.subr.bf16.mxu0 0
    %915 = vmatpush1.bf16.msra.mxu0 %v707
    %916 = vmatprep.mubr.bf16.mxu0 %v285
    %917 = vmatmul.mubr.bf16.gmra.mrb[0].mxu0 %v284
    %v918 = vpop.f32.mrb[0].mxu0
    %v919 = vadd.f32 %v264, %v918
    %v920 = vpop.f32.mrb[0].mxu0
    %v921 = vpop.f32.mrb[0].mxu0
    %v922 = vpop.f32.mrb[0].mxu0
    %923 = vdwg.mxu0
    %924 = vmatprep.subr.bf16.mxu0 0
    %925 = vmatpush1.bf16.msra.mxu0 %v708
    %926 = vmatprep.subr.bf16.mxu0 0
    %927 = vmatpush1.bf16.msra.mxu0 %v709
    %928 = vmatprep.subr.bf16.mxu0 0
    %929 = vmatpush1.bf16.msra.mxu0 %v710
    %930 = vmatprep.subr.bf16.mxu0 0
    %931 = vmatpush1.bf16.msra.mxu0 %v711
    %932 = vmatprep.subr.bf16.mxu0 0
    %933 = vmatpush1.bf16.msra.mxu0 %v712
    %934 = vmatprep.subr.bf16.mxu0 0
    %935 = vmatpush1.bf16.msra.mxu0 %v713
    %936 = vmatprep.subr.bf16.mxu0 0
    %937 = vmatpush1.bf16.msra.mxu0 %v714
    %938 = vmatprep.subr.bf16.mxu0 0
    %939 = vmatpush1.bf16.msra.mxu0 %v715
    %940 = vmatprep.subr.bf16.mxu0 0
    %941 = vmatpush1.bf16.msra.mxu0 %v716
    %942 = vmatprep.subr.bf16.mxu0 0
    %943 = vmatpush1.bf16.msra.mxu0 %v717
    %944 = vmatprep.subr.bf16.mxu0 0
    %945 = vmatpush1.bf16.msra.mxu0 %v718
    %946 = vmatprep.subr.bf16.mxu0 0
    %947 = vmatpush1.bf16.msra.mxu0 %v719
    %948 = vmatprep.subr.bf16.mxu0 0
    %949 = vmatpush1.bf16.msra.mxu0 %v720
    %950 = vmatprep.subr.bf16.mxu0 0
    %951 = vmatpush1.bf16.msra.mxu0 %v721
    %952 = vmatprep.subr.bf16.mxu0 0
    %953 = vmatpush1.bf16.msra.mxu0 %v722
    %954 = vmatprep.subr.bf16.mxu0 0
    %955 = vmatpush1.bf16.msra.mxu0 %v723
    %956 = vmatprep.mubr.bf16.mxu0 %v287
    %957 = vmatmul.mubr.bf16.gmra.mrb[0].mxu0 %v286
    %v958 = vpop.f32.mrb[0].mxu0
    %v959 = vadd.f32 %v919, %v958
    %v960 = vpop.f32.mrb[0].mxu0
    %v961 = vpop.f32.mrb[0].mxu0
    %v962 = vpop.f32.mrb[0].mxu0
    %963 = vdwg.mxu0
    %964 = vmatprep.subr.bf16.mxu0 0
    %965 = vmatpush1.bf16.msra.mxu0 %v724
    %966 = vmatprep.subr.bf16.mxu0 0
    %967 = vmatpush1.bf16.msra.mxu0 %v725
    %968 = vmatprep.subr.bf16.mxu0 0
    %969 = vmatpush1.bf16.msra.mxu0 %v726
    %970 = vmatprep.subr.bf16.mxu0 0
    %971 = vmatpush1.bf16.msra.mxu0 %v727
    %972 = vmatprep.subr.bf16.mxu0 0
    %973 = vmatpush1.bf16.msra.mxu0 %v728
    %974 = vmatprep.subr.bf16.mxu0 0
    %975 = vmatpush1.bf16.msra.mxu0 %v729
    %976 = vmatprep.subr.bf16.mxu0 0
    %977 = vmatpush1.bf16.msra.mxu0 %v730
    %978 = vmatprep.subr.bf16.mxu0 0
    %979 = vmatpush1.bf16.msra.mxu0 %v731
    %980 = vmatprep.subr.bf16.mxu0 0
    %981 = vmatpush1.bf16.msra.mxu0 %v732
    %982 = vmatprep.subr.bf16.mxu0 0
    %983 = vmatpush1.bf16.msra.mxu0 %v733
    %984 = vmatprep.subr.bf16.mxu0 0
    %985 = vmatpush1.bf16.msra.mxu0 %v734
    %986 = vmatprep.subr.bf16.mxu0 0
    %987 = vmatpush1.bf16.msra.mxu0 %v735
    %988 = vmatprep.subr.bf16.mxu0 0
    %989 = vmatpush1.bf16.msra.mxu0 %v736
    %990 = vmatprep.subr.bf16.mxu0 0
    %991 = vmatpush1.bf16.msra.mxu0 %v737
    %992 = vmatprep.subr.bf16.mxu0 0
    %993 = vmatpush1.bf16.msra.mxu0 %v738
    %994 = vmatprep.subr.bf16.mxu0 0
    %995 = vmatpush1.bf16.msra.mxu0 %v739
    %996 = vmatprep.mubr.bf16.mxu0 %v289
    %997 = vmatmul.mubr.bf16.gmra.mrb[0].mxu0 %v288
    %v998 = vpop.f32.mrb[0].mxu0
    %v999 = vadd.f32 %v959, %v998
    %v1000 = vpop.f32.mrb[0].mxu0
    %v1001 = vpop.f32.mrb[0].mxu0
    %v1002 = vpop.f32.mrb[0].mxu0
    %1003 = vdwg.mxu0
    %1004 = vmatprep.subr.bf16.mxu0 0
    %1005 = vmatpush1.bf16.msra.mxu0 %v740
    %1006 = vmatprep.subr.bf16.mxu0 0
    %1007 = vmatpush1.bf16.msra.mxu0 %v741
    %1008 = vmatprep.subr.bf16.mxu0 0
    %1009 = vmatpush1.bf16.msra.mxu0 %v742
    %1010 = vmatprep.subr.bf16.mxu0 0
    %1011 = vmatpush1.bf16.msra.mxu0 %v743
    %1012 = vmatprep.subr.bf16.mxu0 0
    %1013 = vmatpush1.bf16.msra.mxu0 %v744
    %1014 = vmatprep.subr.bf16.mxu0 0
    %1015 = vmatpush1.bf16.msra.mxu0 %v745
    %1016 = vmatprep.subr.bf16.mxu0 0
    %1017 = vmatpush1.bf16.msra.mxu0 %v746
    %1018 = vmatprep.subr.bf16.mxu0 0
    %1019 = vmatpush1.bf16.msra.mxu0 %v747
    %1020 = vmatprep.subr.bf16.mxu0 0
    %1021 = vmatpush1.bf16.msra.mxu0 %v748
    %1022 = vmatprep.subr.bf16.mxu0 0
    %1023 = vmatpush1.bf16.msra.mxu0 %v749
    %1024 = vmatprep.subr.bf16.mxu0 0
    %1025 = vmatpush1.bf16.msra.mxu0 %v750
    %1026 = vmatprep.subr.bf16.mxu0 0
    %1027 = vmatpush1.bf16.msra.mxu0 %v751
    %1028 = vmatprep.subr.bf16.mxu0 0
    %1029 = vmatpush1.bf16.msra.mxu0 %v752
    %1030 = vmatprep.subr.bf16.mxu0 0
    %1031 = vmatpush1.bf16.msra.mxu0 %v753
    %1032 = vmatprep.subr.bf16.mxu0 0
    %1033 = vmatpush1.bf16.msra.mxu0 %v754
    %1034 = vmatprep.subr.bf16.mxu0 0
    %1035 = vmatpush1.bf16.msra.mxu0 %v755
    %1036 = vmatprep.mubr.bf16.mxu0 %v291
    %1037 = vmatmul.mubr.bf16.gmra.mrb[0].mxu0 %v290
    %v1038 = vpop.f32.mrb[0].mxu0
    %v1039 = vadd.f32 %v999, %v1038
    %v1040 = vpop.f32.mrb[0].mxu0
    %v1041 = vpop.f32.mrb[0].mxu0
    %v1042 = vpop.f32.mrb[0].mxu0
    %1043 = vdwg.mxu0
    %1044 = vmatprep.subr.bf16.mxu0 0
    %1045 = vmatpush1.bf16.msra.mxu0 %v756
    %1046 = vmatprep.subr.bf16.mxu0 0
    %1047 = vmatpush1.bf16.msra.mxu0 %v757
    %1048 = vmatprep.subr.bf16.mxu0 0
    %1049 = vmatpush1.bf16.msra.mxu0 %v758
    %1050 = vmatprep.subr.bf16.mxu0 0
    %1051 = vmatpush1.bf16.msra.mxu0 %v759
    %1052 = vmatprep.subr.bf16.mxu0 0
    %1053 = vmatpush1.bf16.msra.mxu0 %v760
    %1054 = vmatprep.subr.bf16.mxu0 0
    %1055 = vmatpush1.bf16.msra.mxu0 %v761
    %1056 = vmatprep.subr.bf16.mxu0 0
    %1057 = vmatpush1.bf16.msra.mxu0 %v762
    %1058 = vmatprep.subr.bf16.mxu0 0
    %1059 = vmatpush1.bf16.msra.mxu0 %v763
    %1060 = vmatprep.subr.bf16.mxu0 0
    %1061 = vmatpush1.bf16.msra.mxu0 %v764
    %1062 = vmatprep.subr.bf16.mxu0 0
    %1063 = vmatpush1.bf16.msra.mxu0 %v765
    %1064 = vmatprep.subr.bf16.mxu0 0
    %1065 = vmatpush1.bf16.msra.mxu0 %v766
    %1066 = vmatprep.subr.bf16.mxu0 0
    %1067 = vmatpush1.bf16.msra.mxu0 %v767
    %1068 = vmatprep.subr.bf16.mxu0 0
    %1069 = vmatpush1.bf16.msra.mxu0 %v768
    %1070 = vmatprep.subr.bf16.mxu0 0
    %1071 = vmatpush1.bf16.msra.mxu0 %v769
    %1072 = vmatprep.subr.bf16.mxu0 0
    %1073 = vmatpush1.bf16.msra.mxu0 %v770
    %1074 = vmatprep.subr.bf16.mxu0 0
    %1075 = vmatpush1.bf16.msra.mxu0 %v771
    %1076 = vmatprep.mubr.bf16.mxu0 %v293
    %1077 = vmatmul.mubr.bf16.gmra.mrb[0].mxu0 %v292
    %v1078 = vpop.f32.mrb[0].mxu0
    %v1079 = vadd.f32 %v1039, %v1078
    %v1080 = vpop.f32.mrb[0].mxu0
    %v1081 = vpop.f32.mrb[0].mxu0
    %v1082 = vpop.f32.mrb[0].mxu0
    %1083 = vdwg.mxu0
    %1084 = vmatprep.subr.bf16.mxu0 0
    %1085 = vmatpush1.bf16.msra.mxu0 %v772
    %1086 = vmatprep.subr.bf16.mxu0 0
    %1087 = vmatpush1.bf16.msra.mxu0 %v773
    %1088 = vmatprep.subr.bf16.mxu0 0
    %1089 = vmatpush1.bf16.msra.mxu0 %v774
    %1090 = vmatprep.subr.bf16.mxu0 0
    %1091 = vmatpush1.bf16.msra.mxu0 %v775
    %1092 = vmatprep.subr.bf16.mxu0 0
    %1093 = vmatpush1.bf16.msra.mxu0 %v776
    %1094 = vmatprep.subr.bf16.mxu0 0
    %1095 = vmatpush1.bf16.msra.mxu0 %v777
    %1096 = vmatprep.subr.bf16.mxu0 0
    %1097 = vmatpush1.bf16.msra.mxu0 %v778
    %1098 = vmatprep.subr.bf16.mxu0 0
    %1099 = vmatpush1.bf16.msra.mxu0 %v779
    %1100 = vmatprep.subr.bf16.mxu0 0
    %1101 = vmatpush1.bf16.msra.mxu0 %v780
    %1102 = vmatprep.subr.bf16.mxu0 0
    %1103 = vmatpush1.bf16.msra.mxu0 %v781
    %1104 = vmatprep.subr.bf16.mxu0 0
    %1105 = vmatpush1.bf16.msra.mxu0 %v782
    %1106 = vmatprep.subr.bf16.mxu0 0
    %1107 = vmatpush1.bf16.msra.mxu0 %v783
    %1108 = vmatprep.subr.bf16.mxu0 0
    %1109 = vmatpush1.bf16.msra.mxu0 %v784
    %1110 = vmatprep.subr.bf16.mxu0 0
    %1111 = vmatpush1.bf16.msra.mxu0 %v785
    %1112 = vmatprep.subr.bf16.mxu0 0
    %1113 = vmatpush1.bf16.msra.mxu0 %v786
    %1114 = vmatprep.subr.bf16.mxu0 0
    %1115 = vmatpush1.bf16.msra.mxu0 %v787
    %1116 = vmatprep.mubr.bf16.mxu0 %v295
    %1117 = vmatmul.mubr.bf16.gmra.mrb[0].mxu0 %v294
    %v1118 = vpop.f32.mrb[0].mxu0
    %v1119 = vadd.f32 %v1079, %v1118
    %v1120 = vpop.f32.mrb[0].mxu0
    %v1121 = vpop.f32.mrb[0].mxu0
    %v1122 = vpop.f32.mrb[0].mxu0
    %1123 = vdwg.mxu0
    %v1124 = vmax.f32 %v1119, 0.0
    %v1125 = vpack.c.bf16 %v1124, %v1124
    %v1126 = vld [vmem:[#allocation7] sm:$0xf]
    %v1127 = vld [vmem:[#allocation7 + $0x4] sm:$0xf]
    %v1128 = vld [vmem:[#allocation7 + $0x8] sm:$0xf]
    %v1129 = vld [vmem:[#allocation7 + $0xc] sm:$0xf]
    %v1130 = vld [vmem:[#allocation7 + $0x10] sm:$0xf]
    %v1131 = vld [vmem:[#allocation7 + $0x14] sm:$0xf]
    %v1132 = vld [vmem:[#allocation7 + $0x18] sm:$0xf]
    %v1133 = vld [vmem:[#allocation7 + $0x1c] sm:$0xf]
    %v1134 = vld [vmem:[#allocation7 + $0x20] sm:$0xf]
    %v1135 = vld [vmem:[#allocation7 + $0x24] sm:$0xf]
    %v1136 = vld [vmem:[#allocation7 + $0x28] sm:$0xf]
    %v1137 = vld [vmem:[#allocation7 + $0x2c] sm:$0xf]
    %v1138 = vld [vmem:[#allocation7 + $0x30] sm:$0xf]
    %v1139 = vld [vmem:[#allocation7 + $0x34] sm:$0xf]
    %v1140 = vld [vmem:[#allocation7 + $0x38] sm:$0xf]
    %v1141 = vld [vmem:[#allocation7 + $0x3c] sm:$0xf]
    %v1142 = vld [vmem:[%s4] sm:$0x1]
    %v1144 = vlaneseq
    %v1145 = vshrl.u32 %v1144, 7
    %v1146 = vsub.s32 0, %v1145
    %v1147 = vrot.slane %v1142, %v1146
    %v1165 = vunpack.c.l.b16 %v1126
    %v1166 = vunpack.c.l.b16 %v1127
    %v1167 = vunpack.c.l.b16 %v1128
    %v1168 = vunpack.c.l.b16 %v1129
    %v1169 = vunpack.c.l.b16 %v1130
    %v1170 = vunpack.c.l.b16 %v1131
    %v1171 = vunpack.c.l.b16 %v1132
    %v1172 = vunpack.c.l.b16 %v1133
    %v1173 = vunpack.c.l.b16 %v1134
    %v1174 = vunpack.c.l.b16 %v1135
    %v1175 = vunpack.c.l.b16 %v1136
    %v1176 = vunpack.c.l.b16 %v1137
    %v1177 = vunpack.c.l.b16 %v1138
    %v1178 = vunpack.c.l.b16 %v1139
    %v1179 = vunpack.c.l.b16 %v1140
    %v1180 = vunpack.c.l.b16 %v1141
    %v1181 = vpack.c.b16 %v1166, %v1165
    %v1182 = vpack.c.b16 %v1168, %v1167
    %v1183 = vpack.c.b16 %v1170, %v1169
    %v1184 = vpack.c.b16 %v1172, %v1171
    %v1185 = vpack.c.b16 %v1174, %v1173
    %v1186 = vpack.c.b16 %v1176, %v1175
    %v1187 = vpack.c.b16 %v1178, %v1177
    %v1188 = vpack.c.b16 %v1180, %v1179
    %1197 = vmatprep.subr.bf16.mxu0 0
    %1198 = vmatpush1.bf16.msra.mxu0 %v1181
    %1199 = vmatprep.subr.bf16.mxu0 0
    %1200 = vmatpush1.bf16.msra.mxu0 %v1182
    %1201 = vmatprep.subr.bf16.mxu0 0
    %1202 = vmatpush1.bf16.msra.mxu0 %v1183
    %1203 = vmatprep.subr.bf16.mxu0 0
    %1204 = vmatpush1.bf16.msra.mxu0 %v1184
    %1205 = vmatprep.subr.bf16.mxu0 0
    %1206 = vmatpush1.bf16.msra.mxu0 %v1185
    %1207 = vmatprep.subr.bf16.mxu0 0
    %1208 = vmatpush1.bf16.msra.mxu0 %v1186
    %1209 = vmatprep.subr.bf16.mxu0 0
    %1210 = vmatpush1.bf16.msra.mxu0 %v1187
    %1211 = vmatprep.subr.bf16.mxu0 0
    %1212 = vmatpush1.bf16.msra.mxu0 %v1188
    %1213 = vmatprep.subr.bf16.mxu0 0
    %1214 = vmatpush1.bf16.msra.mxu0 0
    %1215 = vmatprep.subr.bf16.mxu0 0
    %1216 = vmatpush1.bf16.msra.mxu0 0
    %1217 = vmatprep.subr.bf16.mxu0 0
    %1218 = vmatpush1.bf16.msra.mxu0 0
    %1219 = vmatprep.subr.bf16.mxu0 0
    %1220 = vmatpush1.bf16.msra.mxu0 0
    %1221 = vmatprep.subr.bf16.mxu0 0
    %1222 = vmatpush1.bf16.msra.mxu0 0
    %1223 = vmatprep.subr.bf16.mxu0 0
    %1224 = vmatpush1.bf16.msra.mxu0 0
    %1225 = vmatprep.subr.bf16.mxu0 0
    %1226 = vmatpush1.bf16.msra.mxu0 0
    %1227 = vmatprep.subr.bf16.mxu0 0
    %1228 = vmatpush1.bf16.msra.mxu0 0
    %1229 = vmatprep.mubr.bf16.mxu0 0
    %1230 = vmatmul.mubr.bf16.gmra.mrb[0].mxu0 %v1125
    %v1231 = vpop.f32.mrb[0].mxu0
    %v1232 = vadd.f32 %v1147, %v1231
    %v1233 = vpop.f32.mrb[0].mxu0
    %v1234 = vpop.f32.mrb[0].mxu0
    %v1235 = vpop.f32.mrb[0].mxu0
    %1236 = vdwg.mxu0
    %1237 = vst [vmem:[#allocation8] sm:$0xff] %v1232
    // Predicated region
    $region34: #{tpu_custom_call.1} parent=1 // pred_check
      _
    $region35: #{tpu_custom_call.1} parent=1 // pred_check_branch
      %1239 = sbr.rel (0) target = $region37
    $region36: #{tpu_custom_call.1} parent=1 // pred_region
      %s1241 = ssub.s32 128, 128
      %1242 = vsyncadd [#allocation4], %s1241
      %s1244 = sshll.u32 [#allocation8], 4
      %s1245 = int_to_ptr.vmem [resolvable:$true] %s1244
      %1247 = dma.vmem_to_hbm [thread:$0]  %s1245, 128, %s5, [#allocation4]
    $region37: #{tpu_custom_call.1} parent=1 // pred_fallthru
      _
    // Predicated region
    $region38: #{tpu_custom_call.1} parent=1 // pred_check
      _
    $region39: #{tpu_custom_call.1} parent=1 // pred_check_branch
      %1249 = sbr.rel (0) target = $region41
    $region40: #{tpu_custom_call.1} parent=1 // pred_region
      %1250 = dma.done [#allocation4], 128
    $region41: #{tpu_custom_call.1} parent=1 // pred_fallthru
      _
    %1251 = vsyncpa [#allocation3], 1
    %1252 = vsyncpa [#allocation6], 1
    %1253 = vsyncpa [#allocation4], 1

</llo_original>
